<compile_context>
chip_gen: v7x
topology: tpu7x:2x2x1
jax: 0.10.0
libtpu: 0.0.40
codegen_flags: <defaults>
</compile_context>

<pallas_src>
import functools
from typing import NamedTuple

import jax
import jax.numpy as jnp
from jax import lax
from jax.experimental import pallas as pl
from jax.experimental.pallas import tpu as pltpu


def _round_up(x, m):
    return ((x + m - 1) // m) * m


class GateParams(NamedTuple):
    w: jax.Array          # (F, E_pad)  fc weight, transposed, 1/HW folded in
    b: jax.Array          # (1, E_pad)  fc bias, lane-padded, f32
    in_features: int      # unpadded F the weight was built for
    num_experts: int      # unpadded E
    hw: int                # H*W folded into w


def prepare_gate_params(weight, bias, hw, *, weight_dtype=jnp.float32):
    """One-time parameter prep (do at module init, not per call).

    weight: (E, F) torch-Linear layout; bias: (E,).
    weight_dtype=jnp.bfloat16 halves the weight DMA/VMEM footprint if the slight
    weight rounding is acceptable (the F-reduction is still done in f32 in-kernel).
    """
    E, F = weight.shape
    E_pad = _round_up(E, 128)
    w_scaled = (weight.astype(jnp.float32) / float(hw)).T.astype(weight_dtype)   # (F, E)
    w_prep = jnp.zeros((F, E_pad), weight_dtype).at[:, :E].set(w_scaled)
    b_prep = jnp.zeros((1, E_pad), jnp.float32).at[0, :E].set(bias.astype(jnp.float32))
    return GateParams(w_prep, b_prep, F, E, hw)


def gate_weight_generator_kernel(x_ref, w_ref, b_ref, o_ref, acc_ref, *, hw_total):
    """
    x_ref:   (F, tile_hw)   input dtype -- one spatial chunk of all features
    w_ref:   (F, E_pad)     prepped fc weight (1/HW folded in)
    b_ref:   (1, E_pad)     f32 fc bias
    o_ref:   (1, E_pad)     f32 gate logits (lane-dense)
    acc_ref: (F, 128)       f32 scratch -- per-feature partial spatial sums (per lane)
    hw_total: static int    -- true (unpadded) H*W, for masking the ragged tail
    """
    k = pl.program_id(0)

    @pl.when(k == 0)
    def _init():
        acc_ref[...] = jnp.zeros_like(acc_ref)

    F = acc_ref.shape[0]
    tile_hw = x_ref.shape[1]
    num_chunks = tile_hw // 128                       # tile_hw is a multiple of 128

    # Number of valid lanes in this block (last block may be ragged / OOB garbage).
    valid = hw_total - k * tile_hw                    # traced int32 scalar
    lane_iota = lax.broadcasted_iota(jnp.int32, (F, 128), 1)   # hoisted out of the loop

    def chunk_body(i, carry):
        off = pl.multiple_of(i * 128, 128)
        chunk = x_ref[:, pl.ds(off, 128)].astype(jnp.float32)   # f32 accumulate (v5e-safe)
        mask = (lane_iota + off) < valid
        acc_ref[...] += jnp.where(mask, chunk, 0.0)             # pure VPU adds, no XLU
        return carry

    lax.fori_loop(0, num_chunks, chunk_body, 0)

    @pl.when(k == pl.num_programs(0) - 1)
    def _finalize():
        # Single cross-lane (XLU) reduce, only once at the end.
        pooled = jnp.sum(acc_ref[...], axis=1, keepdims=True)             # (F, 1)
        w = w_ref[...].astype(jnp.float32)                                # (F, E_pad)
        logits = jnp.sum(pooled * w, axis=0, keepdims=True)               # (1, E_pad)
        o_ref[...] = logits + b_ref[...]                                  # unmasked vst


def _vmem_plan():
    """Generation-aware scoped-VMEM limit and x double-buffer budget."""
    try:
        cap = pltpu.get_tpu_info().vmem_capacity_bytes
    except Exception:
        cap = 64 * 1024 * 1024                      # v7x floor; conservative fallback
    vmem_limit = min((cap * 3) // 4, 112 * 1024 * 1024)   # 48 MiB on v7x, 96 MiB on v5e/v6e
    x_db_budget = vmem_limit // 2                   # total for the double-buffered x tile
    return int(vmem_limit), int(x_db_budget)


def _choose_tile_hw(F, HW, itemsize, x_db_budget_bytes, max_tile_hw=None):
    """Pick a 128-multiple spatial tile; slack over HW stays < ~one tile's last column."""
    rows = _round_up(F, 8)                          # sublane-padded row estimate
    bytes_per_col128 = rows * 128 * itemsize
    max_cols = max(1, x_db_budget_bytes // (2 * bytes_per_col128))
    max_lanes = max_cols * 128

    hw128 = _round_up(HW, 128)
    if hw128 <= max_lanes:
        tile_hw = hw128
    else:
        nsteps = pl.cdiv(HW, max_lanes)
        tile_hw = _round_up(pl.cdiv(HW, nsteps), 128)
    if max_tile_hw is not None:
        tile_hw = min(tile_hw, max(128, _round_up(max_tile_hw, 128)))
    return tile_hw


def gate_weight_generator(x_nchw, params: GateParams, *, max_tile_hw=None):
    """
    x_nchw: (N, C, H, W); params from prepare_gate_params (in_features == N*C).
    Returns (num_experts,) f32 logits, matching torch: fc(flatten(pool(x))).
    max_tile_hw: optional cap on the spatial tile (testing / tuning).
    """
    N, C, H, W = x_nchw.shape
    F = N * C
    HW = H * W
    assert F == params.in_features, (
        "torch.flatten flattens batch too: Linear in_features must equal N*C "
        f"(got N*C={F}, params built for {params.in_features})")
    assert HW == params.hw, (
        f"1/(H*W) was folded into the prepped weight for hw={params.hw}, got {HW}")

    E_pad = params.w.shape[1]
    x2d = x_nchw.reshape(F, HW)                     # pure reshape -- no pad, no copy
    itemsize = jnp.dtype(x2d.dtype).itemsize

    vmem_limit, x_db_budget = _vmem_plan()
    tile_hw = _choose_tile_hw(F, HW, itemsize, x_db_budget, max_tile_hw)
    grid_hw = pl.cdiv(HW, tile_hw)

    kernel = functools.partial(gate_weight_generator_kernel, hw_total=HW)

    flops = 2 * F * HW + 2 * F * E_pad
    bytes_accessed = (F * HW * itemsize
                      + params.w.size * jnp.dtype(params.w.dtype).itemsize
                      + 2 * E_pad * 4)

    def build(single_buffer_params):
        # Grid-invariant weight/bias: request single buffering to save VMEM.
        pm = {"pipeline_mode": pl.Buffered(1)} if single_buffer_params else {}
        in_specs = [
            pl.BlockSpec((F, tile_hw), lambda k: (0, k)),
            pl.BlockSpec((F, E_pad), lambda k: (0, 0), **pm),
            pl.BlockSpec((1, E_pad), lambda k: (0, 0), **pm),
        ]
        return pl.pallas_call(
            kernel,
            out_shape=jax.ShapeDtypeStruct((1, E_pad), jnp.float32),
            grid_spec=pltpu.PrefetchScalarGridSpec(
                num_scalar_prefetch=0,
                grid=(grid_hw,),
                in_specs=in_specs,
                out_specs=pl.BlockSpec((1, E_pad), lambda k: (0, 0)),
                scratch_shapes=[pltpu.VMEM((F, 128), jnp.float32)],
            ),
            compiler_params=pltpu.CompilerParams(
                dimension_semantics=("arbitrary",),     # HW is a reduction axis
                vmem_limit_bytes=vmem_limit),
            cost_estimate=pl.CostEstimate(
                flops=flops, transcendentals=0, bytes_accessed=bytes_accessed),
        )

    try:
        out = build(True)(x2d, params.w, params.b)
    except Exception:
        # Fallback for jax versions without pipeline_mode=pl.Buffered support.
        out = build(False)(x2d, params.w, params.b)

    return out[0, :params.num_experts]


def _reference(x_nchw, weight, bias):
    # Pure-JAX reference mirroring the PyTorch forward.
    pooled = jnp.mean(x_nchw.astype(jnp.float32), axis=(2, 3))    # (N, C)
    flat = pooled.reshape(-1)                                      # (N*C,)
    return flat @ weight.astype(jnp.float32).T + bias.astype(jnp.float32)


if __name__ == "__main__":
    # Small shapes consistent with the module's forward (flatten over batch => N=1).
    # H*W = 255 is deliberately not a multiple of 128 so the in-kernel ragged-tail
    # masking path (which replaced the old wrapper-side jnp.pad) is exercised.
    N, C, H, W = 1, 32, 15, 17
    in_channels = N * C
    num_experts = 8

    key = jax.random.PRNGKey(0)
    kx, kw, kb = jax.random.split(key, 3)

    x = jax.random.normal(kx, (N, C, H, W), dtype=jnp.float32)

    # Deterministic Linear init (PyTorch-style uniform(-1/sqrt(fan_in), 1/sqrt(fan_in))).
    bound = 1.0 / (in_channels ** 0.5)
    weight = jax.random.uniform(kw, (num_experts, in_channels),
                                minval=-bound, maxval=bound, dtype=jnp.float32)
    bias = jax.random.uniform(kb, (num_experts,),
                              minval=-bound, maxval=bound, dtype=jnp.float32)

    # One-time parameter prep (folds the 1/(H*W) pooling scale into the weights).
    params = prepare_gate_params(weight, bias, hw=H * W)

    ref = _reference(x, weight, bias)

    # 1) Natural tiling (single grid step, masked tail inside one block).
    out = gate_weight_generator(x, params)
    jax.block_until_ready(out)
    assert out.shape == (num_experts,)
    assert jnp.allclose(out, ref, atol=1e-4, rtol=1e-4), (out, ref)

    # 2) Forced small tile: exercises the multi-step grid reduction, the accumulator
    #    init/finalize path, and the masked ragged last block.
    out_small = gate_weight_generator(x, params, max_tile_hw=128)
    jax.block_until_ready(out_small)
    assert jnp.allclose(out_small, ref, atol=1e-4, rtol=1e-4), (out_small, ref)

    print("KERNEL_OK")
</pallas_src>

<mosaic_0001>
module attributes {stable_mosaic.version = 11 : i64} {
  func.func @gate_weight_generator_kernel(%arg0: i32, %arg1: memref<32x256xf32, #tpu.memory_space<vmem>>, %arg2: memref<32x128xf32, #tpu.memory_space<vmem>>, %arg3: memref<1x128xf32, #tpu.memory_space<vmem>>, %arg4: memref<1x128xf32, #tpu.memory_space<vmem>>, %arg5: memref<32x128xf32, #tpu.memory_space<vmem>>) attributes {dimension_semantics = [#tpu.dimension_semantics<arbitrary>], iteration_bounds = array<i64: 1>, scalar_prefetch = 0 : i64, scratch_operands = 1 : i64, tpu.core_type = #tpu.core_type<tc>, window_params = [{transform_indices = @transform_0, window_bounds = array<i64: 32, 256>}, {pipeline_mode = #tpu.pipeline_mode<synchronous>, transform_indices = @transform_1, window_bounds = array<i64: 32, 128>}, {pipeline_mode = #tpu.pipeline_mode<synchronous>, transform_indices = @transform_2, window_bounds = array<i64: 1, 128>}, {pipeline_mode = #tpu.pipeline_mode<synchronous>, transform_indices = @transform_3, window_bounds = array<i64: 1, 128>}]} {
    %c0_i32 = arith.constant 0 : i32
    %0 = arith.cmpi eq, %arg0, %c0_i32 : i32
    %1 = arith.extui %0 : i1 to i32
    %c0_i32_0 = arith.constant 0 : i32
    %2 = arith.cmpi ne, %1, %c0_i32_0 : i32
    scf.if %2 {
      %cst = arith.constant 0.000000e+00 : f32
      %10 = vector.broadcast %cst : f32 to vector<32x128xf32>
      %c0 = arith.constant 0 : index
      %c0_5 = arith.constant 0 : index
      %11 = vector.load %arg5[%c0, %c0_5] : memref<32x128xf32, #tpu.memory_space<vmem>>, vector<32x128xf32>
      tpu.vector_store %arg5[%c0, %c0_5], %10 {strides = array<i32>} : memref<32x128xf32, #tpu.memory_space<vmem>>, vector<32x128xf32>,
    } else {
    }
    %c256_i32 = arith.constant 256 : i32
    %3 = arith.muli %arg0, %c256_i32 : i32
    %c255_i32 = arith.constant 255 : i32
    %4 = arith.subi %c255_i32, %3 : i32
    %5 = tpu.iota {dimensions = array<i32: 1>} : vector<32x128xi32>
    %c0_i32_1 = arith.constant 0 : i32
    %c2_i32 = arith.constant 2 : i32
    %6 = arith.addi %c0_i32_1, %c2_i32 : i32
    %c1_i32 = arith.constant 1 : i32
    scf.for %arg6 = %c0_i32_1 to %6 step %c1_i32  : i32 {
      %c128_i32 = arith.constant 128 : i32
      %10 = arith.muli %arg6, %c128_i32 : i32
      %11 = tpu.assume_multiple %10, 128 : i32
      %c0 = arith.constant 0 : index
      %12 = arith.index_cast %11 : i32 to index
      %13 = vector.load %arg1[%c0, %12] : memref<32x256xf32, #tpu.memory_space<vmem>>, vector<32x128xf32>
      %14 = vector.broadcast %11 : i32 to vector<32x128xi32>
      %15 = arith.addi %5, %14 : vector<32x128xi32>
      %16 = vector.broadcast %4 : i32 to vector<32x128xi32>
      %17 = arith.cmpi slt, %15, %16 : vector<32x128xi32>
      %c0_5 = arith.constant 0 : index
      %c0_6 = arith.constant 0 : index
      %18 = vector.load %arg5[%c0_5, %c0_6] : memref<32x128xf32, #tpu.memory_space<vmem>>, vector<32x128xf32>
      %cst = arith.constant 0.000000e+00 : f32
      %19 = vector.broadcast %cst : f32 to vector<32x128xf32>
      %20 = arith.select %17, %13, %19 : vector<32x128xi1>, vector<32x128xf32>
      %21 = arith.addf %18, %20 : vector<32x128xf32>
      %c0_7 = arith.constant 0 : index
      %c0_8 = arith.constant 0 : index
      %22 = vector.load %arg5[%c0_7, %c0_8] : memref<32x128xf32, #tpu.memory_space<vmem>>, vector<32x128xf32>
      tpu.vector_store %arg5[%c0_7, %c0_8], %21 {strides = array<i32>} : memref<32x128xf32, #tpu.memory_space<vmem>>, vector<32x128xf32>,
    }
    %c2_i32_2 = arith.constant 2 : i32
    %c0_i32_3 = arith.constant 0 : i32
    %7 = arith.cmpi eq, %arg0, %c0_i32_3 : i32
    %8 = arith.extui %7 : i1 to i32
    %c0_i32_4 = arith.constant 0 : i32
    %9 = arith.cmpi ne, %8, %c0_i32_4 : i32
    scf.if %9 {
      %c0 = arith.constant 0 : index
      %c0_5 = arith.constant 0 : index
      %10 = vector.load %arg5[%c0, %c0_5] : memref<32x128xf32, #tpu.memory_space<vmem>>, vector<32x128xf32>
      %cst = arith.constant dense<0.000000e+00> : vector<32xf32>
      %11 = vector.multi_reduction <add>, %10, %cst [1] : vector<32x128xf32> to vector<32xf32>
      %12 = vector.shape_cast %11 : vector<32xf32> to vector<32x1xf32>
      %c0_6 = arith.constant 0 : index
      %c0_7 = arith.constant 0 : index
      %13 = vector.load %arg2[%c0_6, %c0_7] : memref<32x128xf32, #tpu.memory_space<vmem>>, vector<32x128xf32>
      %14 = vector.broadcast %12 : vector<32x1xf32> to vector<32x128xf32>
      %15 = arith.mulf %14, %13 : vector<32x128xf32>
      %cst_8 = arith.constant dense<0.000000e+00> : vector<128xf32>
      %16 = vector.multi_reduction <add>, %15, %cst_8 [0] : vector<32x128xf32> to vector<128xf32>
      %17 = vector.shape_cast %16 : vector<128xf32> to vector<1x128xf32>
      %c0_9 = arith.constant 0 : index
      %c0_10 = arith.constant 0 : index
      %18 = vector.load %arg3[%c0_9, %c0_10] : memref<1x128xf32, #tpu.memory_space<vmem>>, vector<1x128xf32>
      %19 = arith.addf %17, %18 : vector<1x128xf32>
      %c0_11 = arith.constant 0 : index
      %c0_12 = arith.constant 0 : index
      %20 = vector.load %arg4[%c0_11, %c0_12] : memref<1x128xf32, #tpu.memory_space<vmem>>, vector<1x128xf32>
      tpu.vector_store %arg4[%c0_11, %c0_12], %19 {strides = array<i32>} : memref<1x128xf32, #tpu.memory_space<vmem>>, vector<1x128xf32>,
    } else {
    }
    return
  }
  func.func @transform_0(%arg0: i32) -> (i32, i32) {
    %c0_i32 = arith.constant 0 : i32
    %c0_i32_0 = arith.constant 0 : i32
    return %c0_i32, %arg0 : i32, i32
  }
  func.func @transform_1(%arg0: i32) -> (i32, i32) {
    %c0_i32 = arith.constant 0 : i32
    %c0_i32_0 = arith.constant 0 : i32
    %c0_i32_1 = arith.constant 0 : i32
    return %c0_i32, %c0_i32_0 : i32, i32
  }
  func.func @transform_2(%arg0: i32) -> (i32, i32) {
    %c0_i32 = arith.constant 0 : i32
    %c0_i32_0 = arith.constant 0 : i32
    %c0_i32_1 = arith.constant 0 : i32
    return %c0_i32, %c0_i32_0 : i32, i32
  }
  func.func @transform_3(%arg0: i32) -> (i32, i32) {
    %c0_i32 = arith.constant 0 : i32
    %c0_i32_0 = arith.constant 0 : i32
    %c0_i32_1 = arith.constant 0 : i32
    return %c0_i32, %c0_i32_0 : i32, i32
  }
}

module attributes {stable_mosaic.version = 11 : i64} {
  func.func @gate_weight_generator_kernel(%arg0: i32, %arg1: memref<32x256xf32, #tpu.memory_space<vmem>>, %arg2: memref<32x128xf32, #tpu.memory_space<vmem>>, %arg3: memref<1x128xf32, #tpu.memory_space<vmem>>, %arg4: memref<1x128xf32, #tpu.memory_space<vmem>>, %arg5: memref<32x128xf32, #tpu.memory_space<vmem>>) attributes {dimension_semantics = [#tpu.dimension_semantics<arbitrary>], iteration_bounds = array<i64: 1>, scalar_prefetch = 0 : i64, scratch_operands = 1 : i64, tpu.core_type = #tpu.core_type<tc>, window_params = [{transform_indices = @transform_0, window_bounds = array<i64: 32, 256>}, {pipeline_mode = #tpu.pipeline_mode<synchronous>, transform_indices = @transform_1, window_bounds = array<i64: 32, 128>}, {pipeline_mode = #tpu.pipeline_mode<synchronous>, transform_indices = @transform_2, window_bounds = array<i64: 1, 128>}, {pipeline_mode = #tpu.pipeline_mode<synchronous>, transform_indices = @transform_3, window_bounds = array<i64: 1, 128>}]} {
    %c0_i32 = arith.constant 0 : i32
    %0 = arith.cmpi eq, %arg0, %c0_i32 : i32
    %1 = arith.extui %0 : i1 to i32
    %c0_i32_0 = arith.constant 0 : i32
    %2 = arith.cmpi ne, %1, %c0_i32_0 : i32
    scf.if %2 {
      %cst = arith.constant 0.000000e+00 : f32
      %10 = vector.broadcast %cst : f32 to vector<32x128xf32>
      %c0 = arith.constant 0 : index
      %c0_5 = arith.constant 0 : index
      %11 = vector.load %arg5[%c0, %c0_5] : memref<32x128xf32, #tpu.memory_space<vmem>>, vector<32x128xf32>
      tpu.vector_store %arg5[%c0, %c0_5], %10 {strides = array<i32>} : memref<32x128xf32, #tpu.memory_space<vmem>>, vector<32x128xf32>,
    } else {
    }
    %c256_i32 = arith.constant 256 : i32
    %3 = arith.muli %arg0, %c256_i32 : i32
    %c255_i32 = arith.constant 255 : i32
    %4 = arith.subi %c255_i32, %3 : i32
    %5 = tpu.iota {dimensions = array<i32: 1>} : vector<32x128xi32>
    %c0_i32_1 = arith.constant 0 : i32
    %c2_i32 = arith.constant 2 : i32
    %6 = arith.addi %c0_i32_1, %c2_i32 : i32
    %c1_i32 = arith.constant 1 : i32
    scf.for %arg6 = %c0_i32_1 to %6 step %c1_i32  : i32 {
      %c128_i32 = arith.constant 128 : i32
      %10 = arith.muli %arg6, %c128_i32 : i32
      %11 = tpu.assume_multiple %10, 128 : i32
      %c0 = arith.constant 0 : index
      %12 = arith.index_cast %11 : i32 to index
      %13 = vector.load %arg1[%c0, %12] : memref<32x256xf32, #tpu.memory_space<vmem>>, vector<32x128xf32>
      %14 = vector.broadcast %11 : i32 to vector<32x128xi32>
      %15 = arith.addi %5, %14 : vector<32x128xi32>
      %16 = vector.broadcast %4 : i32 to vector<32x128xi32>
      %17 = arith.cmpi slt, %15, %16 : vector<32x128xi32>
      %c0_5 = arith.constant 0 : index
      %c0_6 = arith.constant 0 : index
      %18 = vector.load %arg5[%c0_5, %c0_6] : memref<32x128xf32, #tpu.memory_space<vmem>>, vector<32x128xf32>
      %cst = arith.constant 0.000000e+00 : f32
      %19 = vector.broadcast %cst : f32 to vector<32x128xf32>
      %20 = arith.select %17, %13, %19 : vector<32x128xi1>, vector<32x128xf32>
      %21 = arith.addf %18, %20 : vector<32x128xf32>
      %c0_7 = arith.constant 0 : index
      %c0_8 = arith.constant 0 : index
      %22 = vector.load %arg5[%c0_7, %c0_8] : memref<32x128xf32, #tpu.memory_space<vmem>>, vector<32x128xf32>
      tpu.vector_store %arg5[%c0_7, %c0_8], %21 {strides = array<i32>} : memref<32x128xf32, #tpu.memory_space<vmem>>, vector<32x128xf32>,
    }
    %c2_i32_2 = arith.constant 2 : i32
    %c0_i32_3 = arith.constant 0 : i32
    %7 = arith.cmpi eq, %arg0, %c0_i32_3 : i32
    %8 = arith.extui %7 : i1 to i32
    %c0_i32_4 = arith.constant 0 : i32
    %9 = arith.cmpi ne, %8, %c0_i32_4 : i32
    scf.if %9 {
      %c0 = arith.constant 0 : index
      %c0_5 = arith.constant 0 : index
      %10 = vector.load %arg5[%c0, %c0_5] : memref<32x128xf32, #tpu.memory_space<vmem>>, vector<32x128xf32>
      %cst = arith.constant dense<0.000000e+00> : vector<32xf32>
      %11 = vector.multi_reduction <add>, %10, %cst [1] : vector<32x128xf32> to vector<32xf32>
      %12 = vector.shape_cast %11 : vector<32xf32> to vector<32x1xf32>
      %c0_6 = arith.constant 0 : index
      %c0_7 = arith.constant 0 : index
      %13 = vector.load %arg2[%c0_6, %c0_7] : memref<32x128xf32, #tpu.memory_space<vmem>>, vector<32x128xf32>
      %14 = vector.broadcast %12 : vector<32x1xf32> to vector<32x128xf32>
      %15 = arith.mulf %14, %13 : vector<32x128xf32>
      %cst_8 = arith.constant dense<0.000000e+00> : vector<128xf32>
      %16 = vector.multi_reduction <add>, %15, %cst_8 [0] : vector<32x128xf32> to vector<128xf32>
      %17 = vector.shape_cast %16 : vector<128xf32> to vector<1x128xf32>
      %c0_9 = arith.constant 0 : index
      %c0_10 = arith.constant 0 : index
      %18 = vector.load %arg3[%c0_9, %c0_10] : memref<1x128xf32, #tpu.memory_space<vmem>>, vector<1x128xf32>
      %19 = arith.addf %17, %18 : vector<1x128xf32>
      %c0_11 = arith.constant 0 : index
      %c0_12 = arith.constant 0 : index
      %20 = vector.load %arg4[%c0_11, %c0_12] : memref<1x128xf32, #tpu.memory_space<vmem>>, vector<1x128xf32>
      tpu.vector_store %arg4[%c0_11, %c0_12], %19 {strides = array<i32>} : memref<1x128xf32, #tpu.memory_space<vmem>>, vector<1x128xf32>,
    } else {
    }
    return
  }
  func.func @transform_0(%arg0: i32) -> (i32, i32) {
    %c0_i32 = arith.constant 0 : i32
    %c0_i32_0 = arith.constant 0 : i32
    return %c0_i32, %arg0 : i32, i32
  }
  func.func @transform_1(%arg0: i32) -> (i32, i32) {
    %c0_i32 = arith.constant 0 : i32
    %c0_i32_0 = arith.constant 0 : i32
    %c0_i32_1 = arith.constant 0 : i32
    return %c0_i32, %c0_i32_0 : i32, i32
  }
  func.func @transform_2(%arg0: i32) -> (i32, i32) {
    %c0_i32 = arith.constant 0 : i32
    %c0_i32_0 = arith.constant 0 : i32
    %c0_i32_1 = arith.constant 0 : i32
    return %c0_i32, %c0_i32_0 : i32, i32
  }
  func.func @transform_3(%arg0: i32) -> (i32, i32) {
    %c0_i32 = arith.constant 0 : i32
    %c0_i32_0 = arith.constant 0 : i32
    %c0_i32_1 = arith.constant 0 : i32
    return %c0_i32, %c0_i32_0 : i32, i32
  }
}

</mosaic_0001>

<llo_original>
// kernel: tpu_custom_call.1
$region0: #{tpu_custom_call.1}
  #allocation0 [shape = 'u32[]', space=smem, size = 0x4, offset = 0x4, fixed_abs, tag = 'smem constant byte address 0x4 - core index']
  #allocation1 [shape = 'u32[144,128]{1,0:T(1,128)}', space=vmem, size = 0x12000, scoped, tag = 'internal scratch']
  #allocation2 [shape = 'f32[32,128]{1,0:T(8,128)}', space=vmem, size = 0x4000, scoped, tag = 'scratch operand']
  %s0 = inlined_call_operand.hbm [shape: f32[32,255], index: 0, kind: input, shape index: {}]
  %s1 = inlined_call_operand.hbm [shape: f32[32,128], index: 1, kind: input, shape index: {}]
  %s2 = inlined_call_operand.vmem [shape: f32[1,128], index: 2, kind: input, shape index: {}]
  %s3 = inlined_call_operand.hbm [shape: f32[1,128], index: 3, kind: output, shape index: {}]
  %s4 = sld [smem:[#allocation0]]
  $region45: #{tpu_custom_call.1} parent=0
    _
  %s6 = ssub.s32 1, %s4
  %s7 = scalar_select 0, %s6, %s4
  $region1: #{tpu_custom_call.1} parent=0
    #allocation3 [shape = 'u8[32768]{0}', space=vmem, size = 0x8000, scoped, tag = 'input window, operand 0, single buffered']
    #allocation4 [shape = 's32[1]{0}', space=sflag, size = 0x4, scoped, tag = 'scoped memory for tpu_custom_call.1']
    #allocation5 [shape = 's32[1]{0}', space=sflag, size = 0x4, scoped, tag = 'scoped memory for tpu_custom_call.1']
    #allocation6 [shape = 'u8[16384]{0}', space=vmem, size = 0x4000, scoped, tag = 'input window, operand 1, single buffered']
    #allocation7 [shape = 's32[1]{0}', space=sflag, size = 0x4, scoped, tag = 'scoped memory for tpu_custom_call.1']
    #allocation8 [shape = 'u8[512]{0}', space=vmem, size = 0x400, scoped, tag = 'output window, operand 0, single buffered']
    %8 = vsyncpa [#allocation4], 0
    %9 = vsyncpa [#allocation7], 0
    %10 = vsyncpa [#allocation5], 0
    // Predicated region
    $region2: #{tpu_custom_call.1} parent=1 // pred_check
      _
    $region3: #{tpu_custom_call.1} parent=1 // pred_check_branch
      %12 = sbr.rel (0) target = $region5
    $region4: #{tpu_custom_call.1} parent=1 // pred_region
      %s14 = ssub.s32 1024, 1024
      %15 = vsyncadd [#allocation4], %s14
      %s16 = sshll.u32 [#allocation3], 4
      %s17 = int_to_ptr.vmem [resolvable:$true] %s16
      %22 = dma.hbm_to_vmem [thread:$0]  %s0, 1024, %s17, [#allocation4], 256, 256, 16
    $region5: #{tpu_custom_call.1} parent=1 // pred_fallthru
      _
    // Predicated region
    $region6: #{tpu_custom_call.1} parent=1 // pred_check
      _
    $region7: #{tpu_custom_call.1} parent=1 // pred_check_branch
      %24 = sbr.rel (0) target = $region9
    $region8: #{tpu_custom_call.1} parent=1 // pred_region
      %s26 = ssub.s32 512, 512
      %27 = vsyncadd [#allocation7], %s26
      %s28 = sshll.u32 [#allocation6], 4
      %s29 = int_to_ptr.vmem [resolvable:$true] %s28
      %34 = dma.hbm_to_vmem [thread:$0]  %s1, 512, %s29, [#allocation7], 128, 128, 8
    $region9: #{tpu_custom_call.1} parent=1 // pred_fallthru
      _
    // Predicated region
    $region10: #{tpu_custom_call.1} parent=1 // pred_check
      _
    $region11: #{tpu_custom_call.1} parent=1 // pred_check_branch
      %36 = sbr.rel (0) target = $region13
    $region12: #{tpu_custom_call.1} parent=1 // pred_region
      _
    $region13: #{tpu_custom_call.1} parent=1 // pred_fallthru
      _
    // Predicated region
    $region14: #{tpu_custom_call.1} parent=1 // pred_check
      _
    $region15: #{tpu_custom_call.1} parent=1 // pred_check_branch
      %38 = sbr.rel (0) target = $region17
    $region16: #{tpu_custom_call.1} parent=1 // pred_region
      %39 = dma.done [#allocation4], 1024
    $region17: #{tpu_custom_call.1} parent=1 // pred_fallthru
      _
    // Predicated region
    $region18: #{tpu_custom_call.1} parent=1 // pred_check
      _
    $region19: #{tpu_custom_call.1} parent=1 // pred_check_branch
      %41 = sbr.rel (0) target = $region21
    $region20: #{tpu_custom_call.1} parent=1 // pred_region
      %42 = dma.done [#allocation7], 512
    $region21: #{tpu_custom_call.1} parent=1 // pred_fallthru
      _
    %p43 = scmp.eq.s32.totalorder 0, 0
    // Predicated region
    $region22: #{tpu_custom_call.1} parent=1 // pred_check
      %p44 = pneg %p43
    $region23: #{tpu_custom_call.1} parent=1 // pred_check_branch
      %46 = sbr.rel (%p44) target = $region25
    $region24: #{tpu_custom_call.1} parent=1 // pred_region
      %47 = vst [vmem:[#allocation2] sm:$0xff] 0.0
      %48 = vst [vmem:[#allocation2 + $0x8] sm:$0xff] 0.0
      %49 = vst [vmem:[#allocation2 + $0x10] sm:$0xff] 0.0
      %50 = vst [vmem:[#allocation2 + $0x18] sm:$0xff] 0.0
    $region25: #{tpu_custom_call.1} parent=1 // pred_fallthru
      _
    %s51 = smul.u32 0, 256
    %s52 = ssub.s32 255, %s51
    %v53 = vlaneseq
    %v54 = vand.u32 %v53, 127
    loop: start=0, step=1, limit=2
    $region26: #{tpu_custom_call.1} parent=1 // loop_pre_header
      _
    $region27: #{tpu_custom_call.1} parent=1 // loop_header
      %s56 = sphi 0, %s60
      %p57 = scmp.ge.s32.totalorder %s56, 2
    $region28: #{tpu_custom_call.1} parent=1 // loop_header_branch
      %59 = sbr.rel (%p57) target = $region32
    $region29: #{tpu_custom_call.1} parent=1 // loop_body
      %s61 = smul.u32 %s56, 128
      %s62 = sshra.s32 %s61, 7
      %s63 = sand.u32 %s61, 127
      %s64 = smul.addr %s62, 8
      %s65 = scalar_lea.vmem [#allocation3], %s64
      %v66 = vld [vmem:[%s65] sm:$0xff]
      %v67 = vld [vmem:[%s65 + $0x10] sm:$0xff]
      %v68 = vld [vmem:[%s65 + $0x20] sm:$0xff]
      %v69 = vld [vmem:[%s65 + $0x30] sm:$0xff]
      %v70 = vstv %s61
      %v71 = vadd.s32 %v54, %v70
      %v72 = vstv %s52
      %vm73 = vcmp.lt.s32.totalorder %v71, %v72
      %v74 = vld [vmem:[#allocation2] sm:$0xff]
      %v75 = vld [vmem:[#allocation2 + $0x8] sm:$0xff]
      %v76 = vld [vmem:[#allocation2 + $0x10] sm:$0xff]
      %v77 = vld [vmem:[#allocation2 + $0x18] sm:$0xff]
      %v78 = vsel %vm73, %v66, 0.0
      %v79 = vsel %vm73, %v67, 0.0
      %v80 = vsel %vm73, %v68, 0.0
      %v81 = vsel %vm73, %v69, 0.0
      %v82 = vadd.f32 %v74, %v78
      %v83 = vadd.f32 %v75, %v79
      %v84 = vadd.f32 %v76, %v80
      %v85 = vadd.f32 %v77, %v81
      %86 = vst [vmem:[#allocation2] sm:$0xff] %v82
      %87 = vst [vmem:[#allocation2 + $0x8] sm:$0xff] %v83
      %88 = vst [vmem:[#allocation2 + $0x10] sm:$0xff] %v84
      %89 = vst [vmem:[#allocation2 + $0x18] sm:$0xff] %v85
    $region30: #{tpu_custom_call.1} parent=1 // loop_footer
      %s60 = sadd.s32 1, %s56
    $region31: #{tpu_custom_call.1} parent=1 // loop_footer_branch
      %55 = sbr.rel target = $region27
    $region32: #{tpu_custom_call.1} parent=1 // loop_exit
      _
    // Predicated region
    $region33: #{tpu_custom_call.1} parent=1 // pred_check
      %p90 = pneg %p43
    $region34: #{tpu_custom_call.1} parent=1 // pred_check_branch
      %92 = sbr.rel (%p90) target = $region36
    $region35: #{tpu_custom_call.1} parent=1 // pred_region
      %v93 = vld [vmem:[#allocation2] sm:$0xff]
      %v94 = vld [vmem:[#allocation2 + $0x8] sm:$0xff]
      %v95 = vld [vmem:[#allocation2 + $0x10] sm:$0xff]
      %v96 = vld [vmem:[#allocation2 + $0x18] sm:$0xff]
      %97 = vadd.xlane.f32.xlu0 %v93
      %v98 = vpop.xlane.xlu0 %97
      %99 = vadd.xlane.f32.xlu0 %v94
      %v100 = vpop.xlane.xlu0 %99
      %101 = vadd.xlane.f32.xlu0 %v95
      %v102 = vpop.xlane.xlu0 %101
      %103 = vadd.xlane.f32.xlu0 %v96
      %v104 = vpop.xlane.xlu0 %103
      %v105 = vld [vmem:[#allocation6] sm:$0xff]
      %v106 = vld [vmem:[#allocation6 + $0x8] sm:$0xff]
      %v107 = vld [vmem:[#allocation6 + $0x10] sm:$0xff]
      %v108 = vld [vmem:[#allocation6 + $0x18] sm:$0xff]
      %v109 = vmul.f32 %v98, %v105
      %v110 = vmul.f32 %v100, %v106
      %v111 = vmul.f32 %v102, %v107
      %v112 = vmul.f32 %v104, %v108
      %v113 = vadd.f32 %v109, %v110
      %v114 = vadd.f32 %v113, %v111
      %v115 = vadd.f32 %v114, %v112
      %v116 = vrot.slane %v115, 4
      %v117 = vadd.f32 %v115, %v116
      %v118 = vrot.slane %v117, 2
      %v119 = vadd.f32 %v117, %v118
      %v120 = vrot.slane %v119, 1
      %v121 = vadd.f32 %v119, %v120
      %v122 = vld [vmem:[%s2] sm:$0x1]
      %v123 = vadd.f32 %v121, %v122
      %124 = vst [vmem:[#allocation8] sm:$0x1] %v123
    $region36: #{tpu_custom_call.1} parent=1 // pred_fallthru
      _
    // Predicated region
    $region37: #{tpu_custom_call.1} parent=1 // pred_check
      _
    $region38: #{tpu_custom_call.1} parent=1 // pred_check_branch
      %126 = sbr.rel (0) target = $region40
    $region39: #{tpu_custom_call.1} parent=1 // pred_region
      %s128 = ssub.s32 16, 16
      %129 = vsyncadd [#allocation5], %s128
      %s131 = sshll.u32 [#allocation8], 4
      %s132 = int_to_ptr.vmem [resolvable:$true] %s131
      %134 = dma.vmem_to_hbm [thread:$0]  %s132, 16, %s3, [#allocation5]
    $region40: #{tpu_custom_call.1} parent=1 // pred_fallthru
      _
    // Predicated region
    $region41: #{tpu_custom_call.1} parent=1 // pred_check
      _
    $region42: #{tpu_custom_call.1} parent=1 // pred_check_branch
      %136 = sbr.rel (0) target = $region44
    $region43: #{tpu_custom_call.1} parent=1 // pred_region
      %137 = dma.done [#allocation5], 16
    $region44: #{tpu_custom_call.1} parent=1 // pred_fallthru
      _
    %138 = vsyncpa [#allocation4], 1
    %139 = vsyncpa [#allocation7], 1
    %140 = vsyncpa [#allocation5], 1

// kernel: tpu_custom_call.1
$region0: #{tpu_custom_call.1}
  #allocation0 [shape = 'u32[]', space=smem, size = 0x4, offset = 0x4, fixed_abs, tag = 'smem constant byte address 0x4 - core index']
  #allocation1 [shape = 'u32[144,128]{1,0:T(1,128)}', space=vmem, size = 0x12000, scoped, tag = 'internal scratch']
  #allocation2 [shape = 'f32[32,128]{1,0:T(8,128)}', space=vmem, size = 0x4000, scoped, tag = 'scratch operand']
  %s0 = inlined_call_operand.hbm [shape: f32[32,255], index: 0, kind: input, shape index: {}]
  %s1 = inlined_call_operand.hbm [shape: f32[32,128], index: 1, kind: input, shape index: {}]
  %s2 = inlined_call_operand.vmem [shape: f32[1,128], index: 2, kind: input, shape index: {}]
  %s3 = inlined_call_operand.hbm [shape: f32[1,128], index: 3, kind: output, shape index: {}]
  %s4 = sld [smem:[#allocation0]]
  $region45: #{tpu_custom_call.1} parent=0
    _
  %s6 = ssub.s32 1, %s4
  %s7 = scalar_select 0, %s6, %s4
  $region1: #{tpu_custom_call.1} parent=0
    #allocation3 [shape = 'u8[32768]{0}', space=vmem, size = 0x8000, scoped, tag = 'input window, operand 0, single buffered']
    #allocation4 [shape = 's32[1]{0}', space=sflag, size = 0x4, scoped, tag = 'scoped memory for tpu_custom_call.1']
    #allocation5 [shape = 's32[1]{0}', space=sflag, size = 0x4, scoped, tag = 'scoped memory for tpu_custom_call.1']
    #allocation6 [shape = 'u8[16384]{0}', space=vmem, size = 0x4000, scoped, tag = 'input window, operand 1, single buffered']
    #allocation7 [shape = 's32[1]{0}', space=sflag, size = 0x4, scoped, tag = 'scoped memory for tpu_custom_call.1']
    #allocation8 [shape = 'u8[512]{0}', space=vmem, size = 0x400, scoped, tag = 'output window, operand 0, single buffered']
    %8 = vsyncpa [#allocation4], 0
    %9 = vsyncpa [#allocation7], 0
    %10 = vsyncpa [#allocation5], 0
    // Predicated region
    $region2: #{tpu_custom_call.1} parent=1 // pred_check
      _
    $region3: #{tpu_custom_call.1} parent=1 // pred_check_branch
      %12 = sbr.rel (0) target = $region5
    $region4: #{tpu_custom_call.1} parent=1 // pred_region
      %s14 = ssub.s32 1024, 1024
      %15 = vsyncadd [#allocation4], %s14
      %s16 = sshll.u32 [#allocation3], 4
      %s17 = int_to_ptr.vmem [resolvable:$true] %s16
      %22 = dma.hbm_to_vmem [thread:$0]  %s0, 1024, %s17, [#allocation4], 256, 256, 16
    $region5: #{tpu_custom_call.1} parent=1 // pred_fallthru
      _
    // Predicated region
    $region6: #{tpu_custom_call.1} parent=1 // pred_check
      _
    $region7: #{tpu_custom_call.1} parent=1 // pred_check_branch
      %24 = sbr.rel (0) target = $region9
    $region8: #{tpu_custom_call.1} parent=1 // pred_region
      %s26 = ssub.s32 512, 512
      %27 = vsyncadd [#allocation7], %s26
      %s28 = sshll.u32 [#allocation6], 4
      %s29 = int_to_ptr.vmem [resolvable:$true] %s28
      %34 = dma.hbm_to_vmem [thread:$0]  %s1, 512, %s29, [#allocation7], 128, 128, 8
    $region9: #{tpu_custom_call.1} parent=1 // pred_fallthru
      _
    // Predicated region
    $region10: #{tpu_custom_call.1} parent=1 // pred_check
      _
    $region11: #{tpu_custom_call.1} parent=1 // pred_check_branch
      %36 = sbr.rel (0) target = $region13
    $region12: #{tpu_custom_call.1} parent=1 // pred_region
      _
    $region13: #{tpu_custom_call.1} parent=1 // pred_fallthru
      _
    // Predicated region
    $region14: #{tpu_custom_call.1} parent=1 // pred_check
      _
    $region15: #{tpu_custom_call.1} parent=1 // pred_check_branch
      %38 = sbr.rel (0) target = $region17
    $region16: #{tpu_custom_call.1} parent=1 // pred_region
      %39 = dma.done [#allocation4], 1024
    $region17: #{tpu_custom_call.1} parent=1 // pred_fallthru
      _
    // Predicated region
    $region18: #{tpu_custom_call.1} parent=1 // pred_check
      _
    $region19: #{tpu_custom_call.1} parent=1 // pred_check_branch
      %41 = sbr.rel (0) target = $region21
    $region20: #{tpu_custom_call.1} parent=1 // pred_region
      %42 = dma.done [#allocation7], 512
    $region21: #{tpu_custom_call.1} parent=1 // pred_fallthru
      _
    %p43 = scmp.eq.s32.totalorder 0, 0
    // Predicated region
    $region22: #{tpu_custom_call.1} parent=1 // pred_check
      %p44 = pneg %p43
    $region23: #{tpu_custom_call.1} parent=1 // pred_check_branch
      %46 = sbr.rel (%p44) target = $region25
    $region24: #{tpu_custom_call.1} parent=1 // pred_region
      %47 = vst [vmem:[#allocation2] sm:$0xff] 0.0
      %48 = vst [vmem:[#allocation2 + $0x8] sm:$0xff] 0.0
      %49 = vst [vmem:[#allocation2 + $0x10] sm:$0xff] 0.0
      %50 = vst [vmem:[#allocation2 + $0x18] sm:$0xff] 0.0
    $region25: #{tpu_custom_call.1} parent=1 // pred_fallthru
      _
    %s51 = smul.u32 0, 256
    %s52 = ssub.s32 255, %s51
    %v53 = vlaneseq
    %v54 = vand.u32 %v53, 127
    loop: start=0, step=1, limit=2
    $region26: #{tpu_custom_call.1} parent=1 // loop_pre_header
      _
    $region27: #{tpu_custom_call.1} parent=1 // loop_header
      %s56 = sphi 0, %s60
      %p57 = scmp.ge.s32.totalorder %s56, 2
    $region28: #{tpu_custom_call.1} parent=1 // loop_header_branch
      %59 = sbr.rel (%p57) target = $region32
    $region29: #{tpu_custom_call.1} parent=1 // loop_body
      %s61 = smul.u32 %s56, 128
      %s62 = sshra.s32 %s61, 7
      %s63 = sand.u32 %s61, 127
      %s64 = smul.addr %s62, 8
      %s65 = scalar_lea.vmem [#allocation3], %s64
      %v66 = vld [vmem:[%s65] sm:$0xff]
      %v67 = vld [vmem:[%s65 + $0x10] sm:$0xff]
      %v68 = vld [vmem:[%s65 + $0x20] sm:$0xff]
      %v69 = vld [vmem:[%s65 + $0x30] sm:$0xff]
      %v70 = vstv %s61
      %v71 = vadd.s32 %v54, %v70
      %v72 = vstv %s52
      %vm73 = vcmp.lt.s32.totalorder %v71, %v72
      %v74 = vld [vmem:[#allocation2] sm:$0xff]
      %v75 = vld [vmem:[#allocation2 + $0x8] sm:$0xff]
      %v76 = vld [vmem:[#allocation2 + $0x10] sm:$0xff]
      %v77 = vld [vmem:[#allocation2 + $0x18] sm:$0xff]
      %v78 = vsel %vm73, %v66, 0.0
      %v79 = vsel %vm73, %v67, 0.0
      %v80 = vsel %vm73, %v68, 0.0
      %v81 = vsel %vm73, %v69, 0.0
      %v82 = vadd.f32 %v74, %v78
      %v83 = vadd.f32 %v75, %v79
      %v84 = vadd.f32 %v76, %v80
      %v85 = vadd.f32 %v77, %v81
      %86 = vst [vmem:[#allocation2] sm:$0xff] %v82
      %87 = vst [vmem:[#allocation2 + $0x8] sm:$0xff] %v83
      %88 = vst [vmem:[#allocation2 + $0x10] sm:$0xff] %v84
      %89 = vst [vmem:[#allocation2 + $0x18] sm:$0xff] %v85
    $region30: #{tpu_custom_call.1} parent=1 // loop_footer
      %s60 = sadd.s32 1, %s56
    $region31: #{tpu_custom_call.1} parent=1 // loop_footer_branch
      %55 = sbr.rel target = $region27
    $region32: #{tpu_custom_call.1} parent=1 // loop_exit
      _
    // Predicated region
    $region33: #{tpu_custom_call.1} parent=1 // pred_check
      %p90 = pneg %p43
    $region34: #{tpu_custom_call.1} parent=1 // pred_check_branch
      %92 = sbr.rel (%p90) target = $region36
    $region35: #{tpu_custom_call.1} parent=1 // pred_region
      %v93 = vld [vmem:[#allocation2] sm:$0xff]
      %v94 = vld [vmem:[#allocation2 + $0x8] sm:$0xff]
      %v95 = vld [vmem:[#allocation2 + $0x10] sm:$0xff]
      %v96 = vld [vmem:[#allocation2 + $0x18] sm:$0xff]
      %97 = vadd.xlane.f32.xlu0 %v93
      %v98 = vpop.xlane.xlu0 %97
      %99 = vadd.xlane.f32.xlu0 %v94
      %v100 = vpop.xlane.xlu0 %99
      %101 = vadd.xlane.f32.xlu0 %v95
      %v102 = vpop.xlane.xlu0 %101
      %103 = vadd.xlane.f32.xlu0 %v96
      %v104 = vpop.xlane.xlu0 %103
      %v105 = vld [vmem:[#allocation6] sm:$0xff]
      %v106 = vld [vmem:[#allocation6 + $0x8] sm:$0xff]
      %v107 = vld [vmem:[#allocation6 + $0x10] sm:$0xff]
      %v108 = vld [vmem:[#allocation6 + $0x18] sm:$0xff]
      %v109 = vmul.f32 %v98, %v105
      %v110 = vmul.f32 %v100, %v106
      %v111 = vmul.f32 %v102, %v107
      %v112 = vmul.f32 %v104, %v108
      %v113 = vadd.f32 %v109, %v110
      %v114 = vadd.f32 %v113, %v111
      %v115 = vadd.f32 %v114, %v112
      %v116 = vrot.slane %v115, 4
      %v117 = vadd.f32 %v115, %v116
      %v118 = vrot.slane %v117, 2
      %v119 = vadd.f32 %v117, %v118
      %v120 = vrot.slane %v119, 1
      %v121 = vadd.f32 %v119, %v120
      %v122 = vld [vmem:[%s2] sm:$0x1]
      %v123 = vadd.f32 %v121, %v122
      %124 = vst [vmem:[#allocation8] sm:$0x1] %v123
    $region36: #{tpu_custom_call.1} parent=1 // pred_fallthru
      _
    // Predicated region
    $region37: #{tpu_custom_call.1} parent=1 // pred_check
      _
    $region38: #{tpu_custom_call.1} parent=1 // pred_check_branch
      %126 = sbr.rel (0) target = $region40
    $region39: #{tpu_custom_call.1} parent=1 // pred_region
      %s128 = ssub.s32 16, 16
      %129 = vsyncadd [#allocation5], %s128
      %s131 = sshll.u32 [#allocation8], 4
      %s132 = int_to_ptr.vmem [resolvable:$true] %s131
      %134 = dma.vmem_to_hbm [thread:$0]  %s132, 16, %s3, [#allocation5]
    $region40: #{tpu_custom_call.1} parent=1 // pred_fallthru
      _
    // Predicated region
    $region41: #{tpu_custom_call.1} parent=1 // pred_check
      _
    $region42: #{tpu_custom_call.1} parent=1 // pred_check_branch
      %136 = sbr.rel (0) target = $region44
    $region43: #{tpu_custom_call.1} parent=1 // pred_region
      %137 = dma.done [#allocation5], 16
    $region44: #{tpu_custom_call.1} parent=1 // pred_fallthru
      _
    %138 = vsyncpa [#allocation4], 1
    %139 = vsyncpa [#allocation7], 1
    %140 = vsyncpa [#allocation5], 1

</llo_original>
